<compile_context>
chip_gen: v7x
topology: tpu7x:2x2x1
jax: 0.10.0
libtpu: 0.0.40
codegen_flags: <defaults>
</compile_context>

<pallas_src>
import functools

import jax
import jax.numpy as jnp
from jax import lax
from jax.experimental import pallas as pl
from jax.experimental.pallas import tpu as pltpu

EPS = 1e-5


# ---------------------------------------------------------------------------
# Kernel: 3 matmuls + bias + ReLU on one [TB, dim_in] batch tile.
# Weights are resident across grid steps (their index_map is constant).
# ---------------------------------------------------------------------------
def mlp3_kernel(x_ref, w1_ref, b1_ref, w2_ref, b2_ref, w3_ref, b3_ref, o_ref):
    x = x_ref[...]
    # Linear(dim_in, l) [BN folded] -> ReLU   (Dropout: identity in eval mode)
    h = jnp.dot(x, w1_ref[...], preferred_element_type=jnp.float32) + b1_ref[...]
    h = jnp.maximum(h, 0.0)
    # Linear(l, l) [BN folded] -> ReLU        (Dropout: identity in eval mode)
    h = jnp.dot(h, w2_ref[...], preferred_element_type=jnp.float32) + b2_ref[...]
    h = jnp.maximum(h, 0.0)
    # Linear(l, dim_out_padded)
    o_ref[...] = (jnp.dot(h, w3_ref[...], preferred_element_type=jnp.float32)
                  + b3_ref[...]).astype(o_ref.dtype)


def _round_up(x, m):
    return -(-x // m) * m


def _fold_params(p):
    """Fold eval-mode BatchNorm into the preceding Linear (f32, on host) and
    pad the last layer to a lane-dense (multiple of 128) output width."""
    s1 = p["g1"] * lax.rsqrt(p["v1"] + EPS)            # (1, l)
    w1f = p["w1"] * s1                                  # (dim_in, l) * (1, l)
    b1f = (p["b1"] - p["m1"]) * s1 + p["be1"]           # (1, l)

    s2 = p["g2"] * lax.rsqrt(p["v2"] + EPS)
    w2f = p["w2"] * s2
    b2f = (p["b2"] - p["m2"]) * s2 + p["be2"]

    dim_out = p["w3"].shape[1]
    dim_out_p = max(128, _round_up(dim_out, 128))
    pad = dim_out_p - dim_out
    w3p = jnp.pad(p["w3"], ((0, 0), (0, pad)))
    b3p = jnp.pad(p["b3"], ((0, 0), (0, pad)))
    return (w1f, b1f, w2f, b2f, w3p, b3p), dim_out, dim_out_p


def _choose_tb(B):
    # Big lane/sublane-friendly tiles for real batches; tight tile for tiny B.
    if B >= 256:
        return 256
    return max(8, _round_up(B, 8))


@functools.partial(jax.jit, static_argnames=())
def mlp3_forward(x, params):
    """x: [B, dim_in] float32. params: dict of weights (see init_params)."""
    (w1f, b1f, w2f, b2f, w3p, b3p), dim_out, dim_out_p = _fold_params(params)

    B, dim_in = x.shape
    l = w1f.shape[1]

    TB = _choose_tb(B)
    B_pad = _round_up(B, TB)
    if B_pad != B:
        x = jnp.pad(x, ((0, B_pad - B), (0, 0)))
    grid = (B_pad // TB,)

    # VMEM footprint: resident weights + double-buffered x/out tiles + intermediates.
    f32 = 4
    footprint = f32 * (dim_in * l + l * l + l * dim_out_p + 2 * l + dim_out_p
                       + 2 * TB * dim_in + 2 * TB * dim_out_p + 2 * TB * l)
    vmem_limit = int(min(max(2 * footprint, 16 << 20), 48 << 20))  # <= v7x 64 MiB

    const = lambda shape: pl.BlockSpec(shape, lambda i: (0, 0))
    out_p = pl.pallas_call(
        mlp3_kernel,
        out_shape=jax.ShapeDtypeStruct((B_pad, dim_out_p), jnp.float32),
        grid=grid,
        in_specs=[
            pl.BlockSpec((TB, dim_in), lambda i: (i, 0)),   # x: tiled over batch
            const(w1f.shape), const(b1f.shape),             # resident weights/biases
            const(w2f.shape), const(b2f.shape),
            const(w3p.shape), const(b3p.shape),
        ],
        out_specs=pl.BlockSpec((TB, dim_out_p), lambda i: (i, 0)),
        compiler_params=pltpu.CompilerParams(
            dimension_semantics=("parallel",),
            vmem_limit_bytes=vmem_limit,
        ),
    )(x, w1f, b1f, w2f, b2f, w3p, b3p)

    return out_p[:B, :dim_out]


# ---------------------------------------------------------------------------
# Deterministic synthetic parameters matching the PyTorch module's shapes.
# PyTorch Linear weight is [out, in]; stored pre-transposed as [in, out].
# ---------------------------------------------------------------------------
def init_params(key, dim_in, l, dim_out):
    ks = jax.random.split(key, 10)

    def lin(kw, kb, fan_in, fan_out):
        w = jax.random.normal(kw, (fan_in, fan_out), jnp.float32) * 0.1
        b = jax.random.normal(kb, (1, fan_out), jnp.float32) * 0.1
        return w, b

    w1, b1 = lin(ks[0], ks[1], dim_in, l)
    w2, b2 = lin(ks[2], ks[3], l, l)
    w3, b3 = lin(ks[4], ks[5], l, dim_out)
    # BatchNorm1d params + running stats (nontrivial so the affine isn't identity)
    g1 = 1.0 + 0.1 * jax.random.normal(ks[6], (1, l), jnp.float32)
    be1 = 0.1 * jax.random.normal(ks[7], (1, l), jnp.float32)
    m1 = 0.05 * jax.random.normal(ks[8], (1, l), jnp.float32)
    v1 = 1.0 + 0.1 * jnp.abs(jax.random.normal(ks[9], (1, l), jnp.float32))
    ks2 = jax.random.split(ks[9], 4)
    g2 = 1.0 + 0.1 * jax.random.normal(ks2[0], (1, l), jnp.float32)
    be2 = 0.1 * jax.random.normal(ks2[1], (1, l), jnp.float32)
    m2 = 0.05 * jax.random.normal(ks2[2], (1, l), jnp.float32)
    v2 = 1.0 + 0.1 * jnp.abs(jax.random.normal(ks2[3], (1, l), jnp.float32))
    return dict(w1=w1, b1=b1, g1=g1, be1=be1, m1=m1, v1=v1,
                w2=w2, b2=b2, g2=g2, be2=be2, m2=m2, v2=v2,
                w3=w3, b3=b3)


def mlp3_reference(x, p):
    h = x @ p["w1"] + p["b1"]
    h = (h - p["m1"]) / jnp.sqrt(p["v1"] + EPS) * p["g1"] + p["be1"]
    h = jnp.maximum(h, 0.0)
    h = h @ p["w2"] + p["b2"]
    h = (h - p["m2"]) / jnp.sqrt(p["v2"] + EPS) * p["g2"] + p["be2"]
    h = jnp.maximum(h, 0.0)
    return h @ p["w3"] + p["b3"]


if __name__ == "__main__":
    B, dim_in, l, dim_out = 8, 32, 128, 16
    key = jax.random.PRNGKey(0)
    kx, kp = jax.random.split(key)
    x = jax.random.normal(kx, (B, dim_in), jnp.float32)
    params = init_params(kp, dim_in, l, dim_out)

    out = mlp3_forward(x, params)
    out = jax.block_until_ready(out)

    ref = mlp3_reference(x, params)
    assert out.shape == (B, dim_out)
    assert jnp.allclose(out, ref, atol=1e-4, rtol=1e-4), "mismatch vs reference"
    print("KERNEL_OK")
</pallas_src>

<mosaic_0001>
module attributes {stable_mosaic.version = 11 : i64} {
  func.func @mlp3_kernel(%arg0: i32, %arg1: memref<8x32xf32, #tpu.memory_space<vmem>>, %arg2: memref<32x128xf32, #tpu.memory_space<vmem>>, %arg3: memref<1x128xf32, #tpu.memory_space<vmem>>, %arg4: memref<128x128xf32, #tpu.memory_space<vmem>>, %arg5: memref<1x128xf32, #tpu.memory_space<vmem>>, %arg6: memref<128x128xf32, #tpu.memory_space<vmem>>, %arg7: memref<1x128xf32, #tpu.memory_space<vmem>>, %arg8: memref<8x128xf32, #tpu.memory_space<vmem>>) attributes {dimension_semantics = [#tpu.dimension_semantics<parallel>], iteration_bounds = array<i64: 1>, scalar_prefetch = 0 : i64, scratch_operands = 0 : i64, tpu.core_type = #tpu.core_type<tc>, window_params = [{transform_indices = @transform_0, window_bounds = array<i64: 8, 32>}, {pipeline_mode = #tpu.pipeline_mode<synchronous>, transform_indices = @transform_1, window_bounds = array<i64: 32, 128>}, {pipeline_mode = #tpu.pipeline_mode<synchronous>, transform_indices = @transform_2, window_bounds = array<i64: 1, 128>}, {pipeline_mode = #tpu.pipeline_mode<synchronous>, transform_indices = @transform_3, window_bounds = array<i64: 128, 128>}, {pipeline_mode = #tpu.pipeline_mode<synchronous>, transform_indices = @transform_4, window_bounds = array<i64: 1, 128>}, {pipeline_mode = #tpu.pipeline_mode<synchronous>, transform_indices = @transform_5, window_bounds = array<i64: 128, 128>}, {pipeline_mode = #tpu.pipeline_mode<synchronous>, transform_indices = @transform_6, window_bounds = array<i64: 1, 128>}, {transform_indices = @transform_7, window_bounds = array<i64: 8, 128>}]} {
    %c0 = arith.constant 0 : index
    %c0_0 = arith.constant 0 : index
    %0 = vector.load %arg1[%c0, %c0_0] : memref<8x32xf32, #tpu.memory_space<vmem>>, vector<8x32xf32>
    %c0_1 = arith.constant 0 : index
    %c0_2 = arith.constant 0 : index
    %1 = vector.load %arg2[%c0_1, %c0_2] : memref<32x128xf32, #tpu.memory_space<vmem>>, vector<32x128xf32>
    %cst = arith.constant dense<0.000000e+00> : vector<8x128xf32>
    %2 = tpu.matmul %0, %1, %cst {dimension_numbers = #tpu.dot_dimension_numbers<[1], [0], [0], [1], [0, 0, 1, 1], [], []>} : vector<8x32xf32>, vector<32x128xf32>, vector<8x128xf32> -> vector<8x128xf32>
    %c0_3 = arith.constant 0 : index
    %c0_4 = arith.constant 0 : index
    %3 = vector.load %arg3[%c0_3, %c0_4] : memref<1x128xf32, #tpu.memory_space<vmem>>, vector<1x128xf32>
    %4 = vector.broadcast %3 : vector<1x128xf32> to vector<8x128xf32>
    %5 = arith.addf %2, %4 : vector<8x128xf32>
    %cst_5 = arith.constant 0.000000e+00 : f32
    %6 = vector.broadcast %cst_5 : f32 to vector<8x128xf32>
    %7 = arith.maximumf %5, %6 : vector<8x128xf32>
    %c0_6 = arith.constant 0 : index
    %c0_7 = arith.constant 0 : index
    %8 = vector.load %arg4[%c0_6, %c0_7] : memref<128x128xf32, #tpu.memory_space<vmem>>, vector<128x128xf32>
    %cst_8 = arith.constant dense<0.000000e+00> : vector<8x128xf32>
    %9 = tpu.matmul %7, %8, %cst_8 {dimension_numbers = #tpu.dot_dimension_numbers<[1], [0], [0], [1], [0, 0, 1, 1], [], []>} : vector<8x128xf32>, vector<128x128xf32>, vector<8x128xf32> -> vector<8x128xf32>
    %c0_9 = arith.constant 0 : index
    %c0_10 = arith.constant 0 : index
    %10 = vector.load %arg5[%c0_9, %c0_10] : memref<1x128xf32, #tpu.memory_space<vmem>>, vector<1x128xf32>
    %11 = vector.broadcast %10 : vector<1x128xf32> to vector<8x128xf32>
    %12 = arith.addf %9, %11 : vector<8x128xf32>
    %cst_11 = arith.constant 0.000000e+00 : f32
    %13 = vector.broadcast %cst_11 : f32 to vector<8x128xf32>
    %14 = arith.maximumf %12, %13 : vector<8x128xf32>
    %c0_12 = arith.constant 0 : index
    %c0_13 = arith.constant 0 : index
    %15 = vector.load %arg6[%c0_12, %c0_13] : memref<128x128xf32, #tpu.memory_space<vmem>>, vector<128x128xf32>
    %cst_14 = arith.constant dense<0.000000e+00> : vector<8x128xf32>
    %16 = tpu.matmul %14, %15, %cst_14 {dimension_numbers = #tpu.dot_dimension_numbers<[1], [0], [0], [1], [0, 0, 1, 1], [], []>} : vector<8x128xf32>, vector<128x128xf32>, vector<8x128xf32> -> vector<8x128xf32>
    %c0_15 = arith.constant 0 : index
    %c0_16 = arith.constant 0 : index
    %17 = vector.load %arg7[%c0_15, %c0_16] : memref<1x128xf32, #tpu.memory_space<vmem>>, vector<1x128xf32>
    %18 = vector.broadcast %17 : vector<1x128xf32> to vector<8x128xf32>
    %19 = arith.addf %16, %18 : vector<8x128xf32>
    %c0_17 = arith.constant 0 : index
    %c0_18 = arith.constant 0 : index
    %20 = vector.load %arg8[%c0_17, %c0_18] : memref<8x128xf32, #tpu.memory_space<vmem>>, vector<8x128xf32>
    tpu.vector_store %arg8[%c0_17, %c0_18], %19 {strides = array<i32>} : memref<8x128xf32, #tpu.memory_space<vmem>>, vector<8x128xf32>,
    return
  }
  func.func @transform_0(%arg0: i32) -> (i32, i32) {
    %c0_i32 = arith.constant 0 : i32
    %c0_i32_0 = arith.constant 0 : i32
    return %arg0, %c0_i32 : i32, i32
  }
  func.func @transform_1(%arg0: i32) -> (i32, i32) {
    %c0_i32 = arith.constant 0 : i32
    %c0_i32_0 = arith.constant 0 : i32
    %c0_i32_1 = arith.constant 0 : i32
    return %c0_i32, %c0_i32_0 : i32, i32
  }
  func.func @transform_2(%arg0: i32) -> (i32, i32) {
    %c0_i32 = arith.constant 0 : i32
    %c0_i32_0 = arith.constant 0 : i32
    %c0_i32_1 = arith.constant 0 : i32
    return %c0_i32, %c0_i32_0 : i32, i32
  }
  func.func @transform_3(%arg0: i32) -> (i32, i32) {
    %c0_i32 = arith.constant 0 : i32
    %c0_i32_0 = arith.constant 0 : i32
    %c0_i32_1 = arith.constant 0 : i32
    return %c0_i32, %c0_i32_0 : i32, i32
  }
  func.func @transform_4(%arg0: i32) -> (i32, i32) {
    %c0_i32 = arith.constant 0 : i32
    %c0_i32_0 = arith.constant 0 : i32
    %c0_i32_1 = arith.constant 0 : i32
    return %c0_i32, %c0_i32_0 : i32, i32
  }
  func.func @transform_5(%arg0: i32) -> (i32, i32) {
    %c0_i32 = arith.constant 0 : i32
    %c0_i32_0 = arith.constant 0 : i32
    %c0_i32_1 = arith.constant 0 : i32
    return %c0_i32, %c0_i32_0 : i32, i32
  }
  func.func @transform_6(%arg0: i32) -> (i32, i32) {
    %c0_i32 = arith.constant 0 : i32
    %c0_i32_0 = arith.constant 0 : i32
    %c0_i32_1 = arith.constant 0 : i32
    return %c0_i32, %c0_i32_0 : i32, i32
  }
  func.func @transform_7(%arg0: i32) -> (i32, i32) {
    %c0_i32 = arith.constant 0 : i32
    %c0_i32_0 = arith.constant 0 : i32
    return %arg0, %c0_i32 : i32, i32
  }
}

</mosaic_0001>

<llo_original>
// kernel: mlp3_forward.1
$region0: #{mlp3_forward.1}
  #allocation0 [shape = 'u32[]', space=smem, size = 0x4, offset = 0x4, fixed_abs, tag = 'smem constant byte address 0x4 - core index']
  #allocation1 [shape = 'u32[144,128]{1,0:T(1,128)}', space=vmem, size = 0x12000, scoped, tag = 'internal scratch']
  %s0 = inlined_call_operand.vmem [shape: f32[8,32], index: 0, kind: input, shape index: {}]
  %s1 = inlined_call_operand.vmem [shape: f32[32,128], index: 1, kind: input, shape index: {}]
  %s2 = inlined_call_operand.vmem [shape: f32[1,128], index: 2, kind: input, shape index: {}]
  %s3 = inlined_call_operand.vmem [shape: f32[128,128], index: 3, kind: input, shape index: {}]
  %s4 = inlined_call_operand.vmem [shape: f32[1,128], index: 4, kind: input, shape index: {}]
  %s5 = inlined_call_operand.vmem [shape: f32[128,128], index: 5, kind: input, shape index: {}]
  %s6 = inlined_call_operand.vmem [shape: f32[1,128], index: 6, kind: input, shape index: {}]
  %s7 = inlined_call_operand.hbm [shape: f32[8,128], index: 7, kind: output, shape index: {}]
  %s8 = sld [smem:[#allocation0]]
  $region38: #{mlp3_forward.1} parent=0
    _
  %s10 = ssub.s32 1, %s8
  %s11 = scalar_select 0, %s10, %s8
  $region1: #{mlp3_forward.1} parent=0
    #allocation2 [shape = 'u8[4096]{0}', space=vmem, size = 0x1000, scoped, tag = 'output window, operand 0, single buffered']
    #allocation3 [shape = 's32[1]{0}', space=sflag, size = 0x4, scoped, tag = 'scoped memory for mlp3_forward.1']
    %12 = vsyncpa [#allocation3], 0
    // Predicated region
    $region2: #{mlp3_forward.1} parent=1 // pred_check
      _
    $region3: #{mlp3_forward.1} parent=1 // pred_check_branch
      %14 = sbr.rel (0) target = $region5
    $region4: #{mlp3_forward.1} parent=1 // pred_region
      _
    $region5: #{mlp3_forward.1} parent=1 // pred_fallthru
      _
    // Predicated region
    $region6: #{mlp3_forward.1} parent=1 // pred_check
      _
    $region7: #{mlp3_forward.1} parent=1 // pred_check_branch
      %16 = sbr.rel (0) target = $region9
    $region8: #{mlp3_forward.1} parent=1 // pred_region
      _
    $region9: #{mlp3_forward.1} parent=1 // pred_fallthru
      _
    // Predicated region
    $region10: #{mlp3_forward.1} parent=1 // pred_check
      _
    $region11: #{mlp3_forward.1} parent=1 // pred_check_branch
      %18 = sbr.rel (0) target = $region13
    $region12: #{mlp3_forward.1} parent=1 // pred_region
      _
    $region13: #{mlp3_forward.1} parent=1 // pred_fallthru
      _
    // Predicated region
    $region14: #{mlp3_forward.1} parent=1 // pred_check
      _
    $region15: #{mlp3_forward.1} parent=1 // pred_check_branch
      %20 = sbr.rel (0) target = $region17
    $region16: #{mlp3_forward.1} parent=1 // pred_region
      _
    $region17: #{mlp3_forward.1} parent=1 // pred_fallthru
      _
    // Predicated region
    $region18: #{mlp3_forward.1} parent=1 // pred_check
      _
    $region19: #{mlp3_forward.1} parent=1 // pred_check_branch
      %22 = sbr.rel (0) target = $region21
    $region20: #{mlp3_forward.1} parent=1 // pred_region
      _
    $region21: #{mlp3_forward.1} parent=1 // pred_fallthru
      _
    // Predicated region
    $region22: #{mlp3_forward.1} parent=1 // pred_check
      _
    $region23: #{mlp3_forward.1} parent=1 // pred_check_branch
      %24 = sbr.rel (0) target = $region25
    $region24: #{mlp3_forward.1} parent=1 // pred_region
      _
    $region25: #{mlp3_forward.1} parent=1 // pred_fallthru
      _
    // Predicated region
    $region26: #{mlp3_forward.1} parent=1 // pred_check
      _
    $region27: #{mlp3_forward.1} parent=1 // pred_check_branch
      %26 = sbr.rel (0) target = $region29
    $region28: #{mlp3_forward.1} parent=1 // pred_region
      _
    $region29: #{mlp3_forward.1} parent=1 // pred_fallthru
      _
    %v27 = vld [vmem:[%s0] sm:$0xff]
    %v28 = vld [vmem:[%s1] sm:$0xff]
    %v29 = vld [vmem:[%s1 + $0x8] sm:$0xff]
    %v30 = vld [vmem:[%s1 + $0x10] sm:$0xff]
    %v31 = vld [vmem:[%s1 + $0x18] sm:$0xff]
    %v32 = vld [vmem:[%s2] sm:$0x1]
    %v34 = vlaneseq
    %v35 = vshrl.u32 %v34, 7
    %v36 = vsub.s32 0, %v35
    %v37 = vrot.slane %v32, %v36
    %vm39 = vcmask 261120
    %v41 = vsel %vm39, %v27, 0
    %43 = vmatprep.subr.mxu0 0.0
    %44 = vmatpush1.msra.mxu0 %v28
    %45 = vmatprep.subr.mxu0 0.0
    %46 = vmatpush1.msra.mxu0 %v29
    %47 = vmatprep.subr.mxu0 0.0
    %48 = vmatpush1.msra.mxu0 %v30
    %49 = vmatprep.subr.mxu0 0.0
    %50 = vmatpush1.msra.mxu0 %v31
    %51 = vmatprep.subr.mxu0 0.0
    %52 = vmatpush1.msra.mxu0 0.0
    %53 = vmatprep.subr.mxu0 0.0
    %54 = vmatpush1.msra.mxu0 0.0
    %55 = vmatprep.subr.mxu0 0.0
    %56 = vmatpush1.msra.mxu0 0.0
    %57 = vmatprep.subr.mxu0 0.0
    %58 = vmatpush1.msra.mxu0 0.0
    %59 = vmatprep.subr.mxu0 0.0
    %60 = vmatpush1.msra.mxu0 0.0
    %61 = vmatprep.subr.mxu0 0.0
    %62 = vmatpush1.msra.mxu0 0.0
    %63 = vmatprep.subr.mxu0 0.0
    %64 = vmatpush1.msra.mxu0 0.0
    %65 = vmatprep.subr.mxu0 0.0
    %66 = vmatpush1.msra.mxu0 0.0
    %67 = vmatprep.subr.mxu0 0.0
    %68 = vmatpush1.msra.mxu0 0.0
    %69 = vmatprep.subr.mxu0 0.0
    %70 = vmatpush1.msra.mxu0 0.0
    %71 = vmatprep.subr.mxu0 0.0
    %72 = vmatpush1.msra.mxu0 0.0
    %73 = vmatprep.subr.mxu0 0.0
    %74 = vmatpush1.msra.mxu0 0.0
    %75 = vmatprep.subr.mxu0 0.0
    %76 = vmatpush1.msra.mxu0 0.0
    %77 = vmatprep.subr.mxu0 0.0
    %78 = vmatpush1.msra.mxu0 0.0
    %79 = vmatprep.subr.mxu0 0.0
    %80 = vmatpush1.msra.mxu0 0.0
    %81 = vmatprep.subr.mxu0 0.0
    %82 = vmatpush1.msra.mxu0 0.0
    %83 = vmatprep.subr.mxu0 0.0
    %84 = vmatpush1.msra.mxu0 0.0
    %85 = vmatprep.subr.mxu0 0.0
    %86 = vmatpush1.msra.mxu0 0.0
    %87 = vmatprep.subr.mxu0 0.0
    %88 = vmatpush1.msra.mxu0 0.0
    %89 = vmatprep.subr.mxu0 0.0
    %90 = vmatpush1.msra.mxu0 0.0
    %91 = vmatprep.subr.mxu0 0.0
    %92 = vmatpush1.msra.mxu0 0.0
    %93 = vmatprep.subr.mxu0 0.0
    %94 = vmatpush1.msra.mxu0 0.0
    %95 = vmatprep.subr.mxu0 0.0
    %96 = vmatpush1.msra.mxu0 0.0
    %97 = vmatprep.subr.mxu0 0.0
    %98 = vmatpush1.msra.mxu0 0.0
    %99 = vmatprep.subr.mxu0 0.0
    %100 = vmatpush1.msra.mxu0 0.0
    %101 = vmatprep.subr.mxu0 0.0
    %102 = vmatpush1.msra.mxu0 0.0
    %103 = vmatprep.subr.mxu0 0.0
    %104 = vmatpush1.msra.mxu0 0.0
    %105 = vmatprep.subr.mxu0 0.0
    %106 = vmatpush1.msra.mxu0 0.0
    %107 = vmatprep.mubr.f32.mxu0 0.0
    %108 = vmatmul.mubr.f32.gmra.mrb[0].mxu0 %v41
    %v109 = vpop.f32.mrb[0].mxu0
    %v110 = vadd.f32 %v37, %v109
    %v111 = vpop.f32.mrb[0].mxu0
    %112 = vdwg.mxu0
    %v113 = vmax.f32 %v110, 0.0
    %v114 = vld [vmem:[%s3] sm:$0xff]
    %v115 = vld [vmem:[%s3 + $0x8] sm:$0xff]
    %v116 = vld [vmem:[%s3 + $0x10] sm:$0xff]
    %v117 = vld [vmem:[%s3 + $0x18] sm:$0xff]
    %v118 = vld [vmem:[%s3 + $0x20] sm:$0xff]
    %v119 = vld [vmem:[%s3 + $0x28] sm:$0xff]
    %v120 = vld [vmem:[%s3 + $0x30] sm:$0xff]
    %v121 = vld [vmem:[%s3 + $0x38] sm:$0xff]
    %v122 = vld [vmem:[%s3 + $0x40] sm:$0xff]
    %v123 = vld [vmem:[%s3 + $0x48] sm:$0xff]
    %v124 = vld [vmem:[%s3 + $0x50] sm:$0xff]
    %v125 = vld [vmem:[%s3 + $0x58] sm:$0xff]
    %v126 = vld [vmem:[%s3 + $0x60] sm:$0xff]
    %v127 = vld [vmem:[%s3 + $0x68] sm:$0xff]
    %v128 = vld [vmem:[%s3 + $0x70] sm:$0xff]
    %v129 = vld [vmem:[%s3 + $0x78] sm:$0xff]
    %v130 = vld [vmem:[%s4] sm:$0x1]
    %v132 = vlaneseq
    %v133 = vshrl.u32 %v132, 7
    %v134 = vsub.s32 0, %v133
    %v135 = vrot.slane %v130, %v134
    %137 = vmatprep.subr.mxu0 0.0
    %138 = vmatpush1.msra.mxu0 %v114
    %139 = vmatprep.subr.mxu0 0.0
    %140 = vmatpush1.msra.mxu0 %v115
    %141 = vmatprep.subr.mxu0 0.0
    %142 = vmatpush1.msra.mxu0 %v116
    %143 = vmatprep.subr.mxu0 0.0
    %144 = vmatpush1.msra.mxu0 %v117
    %145 = vmatprep.subr.mxu0 0.0
    %146 = vmatpush1.msra.mxu0 %v118
    %147 = vmatprep.subr.mxu0 0.0
    %148 = vmatpush1.msra.mxu0 %v119
    %149 = vmatprep.subr.mxu0 0.0
    %150 = vmatpush1.msra.mxu0 %v120
    %151 = vmatprep.subr.mxu0 0.0
    %152 = vmatpush1.msra.mxu0 %v121
    %153 = vmatprep.subr.mxu0 0.0
    %154 = vmatpush1.msra.mxu0 %v122
    %155 = vmatprep.subr.mxu0 0.0
    %156 = vmatpush1.msra.mxu0 %v123
    %157 = vmatprep.subr.mxu0 0.0
    %158 = vmatpush1.msra.mxu0 %v124
    %159 = vmatprep.subr.mxu0 0.0
    %160 = vmatpush1.msra.mxu0 %v125
    %161 = vmatprep.subr.mxu0 0.0
    %162 = vmatpush1.msra.mxu0 %v126
    %163 = vmatprep.subr.mxu0 0.0
    %164 = vmatpush1.msra.mxu0 %v127
    %165 = vmatprep.subr.mxu0 0.0
    %166 = vmatpush1.msra.mxu0 %v128
    %167 = vmatprep.subr.mxu0 0.0
    %168 = vmatpush1.msra.mxu0 %v129
    %169 = vmatprep.subr.mxu0 0.0
    %170 = vmatpush1.msra.mxu0 0.0
    %171 = vmatprep.subr.mxu0 0.0
    %172 = vmatpush1.msra.mxu0 0.0
    %173 = vmatprep.subr.mxu0 0.0
    %174 = vmatpush1.msra.mxu0 0.0
    %175 = vmatprep.subr.mxu0 0.0
    %176 = vmatpush1.msra.mxu0 0.0
    %177 = vmatprep.subr.mxu0 0.0
    %178 = vmatpush1.msra.mxu0 0.0
    %179 = vmatprep.subr.mxu0 0.0
    %180 = vmatpush1.msra.mxu0 0.0
    %181 = vmatprep.subr.mxu0 0.0
    %182 = vmatpush1.msra.mxu0 0.0
    %183 = vmatprep.subr.mxu0 0.0
    %184 = vmatpush1.msra.mxu0 0.0
    %185 = vmatprep.subr.mxu0 0.0
    %186 = vmatpush1.msra.mxu0 0.0
    %187 = vmatprep.subr.mxu0 0.0
    %188 = vmatpush1.msra.mxu0 0.0
    %189 = vmatprep.subr.mxu0 0.0
    %190 = vmatpush1.msra.mxu0 0.0
    %191 = vmatprep.subr.mxu0 0.0
    %192 = vmatpush1.msra.mxu0 0.0
    %193 = vmatprep.subr.mxu0 0.0
    %194 = vmatpush1.msra.mxu0 0.0
    %195 = vmatprep.subr.mxu0 0.0
    %196 = vmatpush1.msra.mxu0 0.0
    %197 = vmatprep.subr.mxu0 0.0
    %198 = vmatpush1.msra.mxu0 0.0
    %199 = vmatprep.subr.mxu0 0.0
    %200 = vmatpush1.msra.mxu0 0.0
    %201 = vmatprep.mubr.f32.mxu0 0.0
    %202 = vmatmul.mubr.f32.gmra.mrb[0].mxu0 %v113
    %v203 = vpop.f32.mrb[0].mxu0
    %v204 = vadd.f32 %v135, %v203
    %v205 = vpop.f32.mrb[0].mxu0
    %206 = vdwg.mxu0
    %v207 = vmax.f32 %v204, 0.0
    %v208 = vld [vmem:[%s5] sm:$0xff]
    %v209 = vld [vmem:[%s5 + $0x8] sm:$0xff]
    %v210 = vld [vmem:[%s5 + $0x10] sm:$0xff]
    %v211 = vld [vmem:[%s5 + $0x18] sm:$0xff]
    %v212 = vld [vmem:[%s5 + $0x20] sm:$0xff]
    %v213 = vld [vmem:[%s5 + $0x28] sm:$0xff]
    %v214 = vld [vmem:[%s5 + $0x30] sm:$0xff]
    %v215 = vld [vmem:[%s5 + $0x38] sm:$0xff]
    %v216 = vld [vmem:[%s5 + $0x40] sm:$0xff]
    %v217 = vld [vmem:[%s5 + $0x48] sm:$0xff]
    %v218 = vld [vmem:[%s5 + $0x50] sm:$0xff]
    %v219 = vld [vmem:[%s5 + $0x58] sm:$0xff]
    %v220 = vld [vmem:[%s5 + $0x60] sm:$0xff]
    %v221 = vld [vmem:[%s5 + $0x68] sm:$0xff]
    %v222 = vld [vmem:[%s5 + $0x70] sm:$0xff]
    %v223 = vld [vmem:[%s5 + $0x78] sm:$0xff]
    %v224 = vld [vmem:[%s6] sm:$0x1]
    %v226 = vlaneseq
    %v227 = vshrl.u32 %v226, 7
    %v228 = vsub.s32 0, %v227
    %v229 = vrot.slane %v224, %v228
    %231 = vmatprep.subr.mxu0 0.0
    %232 = vmatpush1.msra.mxu0 %v208
    %233 = vmatprep.subr.mxu0 0.0
    %234 = vmatpush1.msra.mxu0 %v209
    %235 = vmatprep.subr.mxu0 0.0
    %236 = vmatpush1.msra.mxu0 %v210
    %237 = vmatprep.subr.mxu0 0.0
    %238 = vmatpush1.msra.mxu0 %v211
    %239 = vmatprep.subr.mxu0 0.0
    %240 = vmatpush1.msra.mxu0 %v212
    %241 = vmatprep.subr.mxu0 0.0
    %242 = vmatpush1.msra.mxu0 %v213
    %243 = vmatprep.subr.mxu0 0.0
    %244 = vmatpush1.msra.mxu0 %v214
    %245 = vmatprep.subr.mxu0 0.0
    %246 = vmatpush1.msra.mxu0 %v215
    %247 = vmatprep.subr.mxu0 0.0
    %248 = vmatpush1.msra.mxu0 %v216
    %249 = vmatprep.subr.mxu0 0.0
    %250 = vmatpush1.msra.mxu0 %v217
    %251 = vmatprep.subr.mxu0 0.0
    %252 = vmatpush1.msra.mxu0 %v218
    %253 = vmatprep.subr.mxu0 0.0
    %254 = vmatpush1.msra.mxu0 %v219
    %255 = vmatprep.subr.mxu0 0.0
    %256 = vmatpush1.msra.mxu0 %v220
    %257 = vmatprep.subr.mxu0 0.0
    %258 = vmatpush1.msra.mxu0 %v221
    %259 = vmatprep.subr.mxu0 0.0
    %260 = vmatpush1.msra.mxu0 %v222
    %261 = vmatprep.subr.mxu0 0.0
    %262 = vmatpush1.msra.mxu0 %v223
    %263 = vmatprep.subr.mxu0 0.0
    %264 = vmatpush1.msra.mxu0 0.0
    %265 = vmatprep.subr.mxu0 0.0
    %266 = vmatpush1.msra.mxu0 0.0
    %267 = vmatprep.subr.mxu0 0.0
    %268 = vmatpush1.msra.mxu0 0.0
    %269 = vmatprep.subr.mxu0 0.0
    %270 = vmatpush1.msra.mxu0 0.0
    %271 = vmatprep.subr.mxu0 0.0
    %272 = vmatpush1.msra.mxu0 0.0
    %273 = vmatprep.subr.mxu0 0.0
    %274 = vmatpush1.msra.mxu0 0.0
    %275 = vmatprep.subr.mxu0 0.0
    %276 = vmatpush1.msra.mxu0 0.0
    %277 = vmatprep.subr.mxu0 0.0
    %278 = vmatpush1.msra.mxu0 0.0
    %279 = vmatprep.subr.mxu0 0.0
    %280 = vmatpush1.msra.mxu0 0.0
    %281 = vmatprep.subr.mxu0 0.0
    %282 = vmatpush1.msra.mxu0 0.0
    %283 = vmatprep.subr.mxu0 0.0
    %284 = vmatpush1.msra.mxu0 0.0
    %285 = vmatprep.subr.mxu0 0.0
    %286 = vmatpush1.msra.mxu0 0.0
    %287 = vmatprep.subr.mxu0 0.0
    %288 = vmatpush1.msra.mxu0 0.0
    %289 = vmatprep.subr.mxu0 0.0
    %290 = vmatpush1.msra.mxu0 0.0
    %291 = vmatprep.subr.mxu0 0.0
    %292 = vmatpush1.msra.mxu0 0.0
    %293 = vmatprep.subr.mxu0 0.0
    %294 = vmatpush1.msra.mxu0 0.0
    %295 = vmatprep.mubr.f32.mxu0 0.0
    %296 = vmatmul.mubr.f32.gmra.mrb[0].mxu0 %v207
    %v297 = vpop.f32.mrb[0].mxu0
    %v298 = vadd.f32 %v229, %v297
    %v299 = vpop.f32.mrb[0].mxu0
    %300 = vdwg.mxu0
    %301 = vst [vmem:[#allocation2] sm:$0xff] %v298
    // Predicated region
    $region30: #{mlp3_forward.1} parent=1 // pred_check
      _
    $region31: #{mlp3_forward.1} parent=1 // pred_check_branch
      %303 = sbr.rel (0) target = $region33
    $region32: #{mlp3_forward.1} parent=1 // pred_region
      %s305 = ssub.s32 128, 128
      %306 = vsyncadd [#allocation3], %s305
      %s308 = sshll.u32 [#allocation2], 4
      %s309 = int_to_ptr.vmem [resolvable:$true] %s308
      %311 = dma.vmem_to_hbm [thread:$0]  %s309, 128, %s7, [#allocation3]
    $region33: #{mlp3_forward.1} parent=1 // pred_fallthru
      _
    // Predicated region
    $region34: #{mlp3_forward.1} parent=1 // pred_check
      _
    $region35: #{mlp3_forward.1} parent=1 // pred_check_branch
      %313 = sbr.rel (0) target = $region37
    $region36: #{mlp3_forward.1} parent=1 // pred_region
      %314 = dma.done [#allocation3], 128
    $region37: #{mlp3_forward.1} parent=1 // pred_fallthru
      _
    %315 = vsyncpa [#allocation3], 1

</llo_original>
